<compile_context>
chip_gen: v6e
topology: v6e:2x2x1
jax: 0.10.0
libtpu: 0.0.40
codegen_flags: <defaults>
</compile_context>

<pallas_src>
import jax
import jax.numpy as jnp
from jax.experimental import pallas as pl
from jax.experimental.pallas import tpu as pltpu


_MIN_PARALLEL_STEPS = 4            # >= 2*TCs on v7x; keeps writeback pipelined everywhere
_VMEM_LIMIT_BYTES = 48 * 1024 * 1024   # v7x-safe (64 MiB/TC); raise to 64-96 MiB on v5e/v6e


def make_normalizing_flow_kernel(num_flows: int, reuse_slab: bool):
    """Builds a kernel applying `num_flows` planar flows to one (tm, d) row tile."""

    def kernel(x_ref, w_ref, u_ref, b_ref, wu_ref, zs_ref, ldj_ref):
        # x_ref : (tm, d) VMEM        w_ref/u_ref : (K, d) VMEM (f32, resident)
        # b_ref : (K,) SMEM           wu_ref      : (K,) SMEM (precomputed w_k.u_k)
        # zs_ref: (K+1, tm, d) VMEM   ldj_ref     : (tm, 1) VMEM (f32)
        tm = x_ref.shape[0]
        z = x_ref[...].astype(jnp.float32)                     # (tm, d)
        zs_ref[0] = z.astype(zs_ref.dtype)                     # zs[0] = x

        # Running product of per-flow |det| terms; one log at the very end
        # replaces K logs through the single EUP (log(prod t_k) == sum log t_k,
        # the +1e-8 epsilon is still applied per term as in the reference).
        prod = jnp.ones((tm, 1), jnp.float32)

        # K is a small static Python int -> straight-line unrolled loop.
        for k in range(num_flows):
            if reuse_slab:
                # Use the output slab as the working state buffer: a live
                # (tm, d) carry exceeds the 64-vreg file at large tm and would
                # spill, paying spill-store + spill-load + a second store.
                z = zs_ref[k].astype(jnp.float32)

            # TODO(synk): stride-0 sublane-broadcast load would replicate w/u
            # in the vld slot instead of a VPU broadcast; negligible at small K.
            w = w_ref[pl.ds(k, 1), :]                          # (1, d) f32
            u = u_ref[pl.ds(k, 1), :]                          # (1, d) f32
            b = b_ref[k]                                       # scalar (SMEM)
            wu = wu_ref[k]                                     # scalar (SMEM)

            # Per-row linear form on VPU + lane reduce (a 1-column MXU matvec
            # would waste 255/256 of the array and force a w transpose).
            lin = jnp.sum(z * w, axis=-1, keepdims=True) + b   # (tm, 1)
            h = jnp.tanh(lin)                                  # (tm, 1), EUP

            z = z + h * u                                      # (tm, d) flow update
            zs_ref[k + 1] = z.astype(zs_ref.dtype)

            # Exact rewrite: sum(((1-h^2)*w)*u, -1) == (1-h^2) * dot(w_k, u_k).
            prod = prod * (jnp.abs(1.0 + (1.0 - h * h) * wu) + 1e-8)

        ldj_ref[...] = jnp.log(prod)

    return kernel


def _choose_tm(m, d, K, vmem_budget_bytes=40 * 2**20, max_tm=4096):
    """Pick a batch-tile size against a double-buffered VMEM budget.

    Per-row f32 footprint (double-buffered): x tile (d) + zs slab ((K+1)*d)
    + lane-padded ldj (128).  The 40 MiB budget leaves headroom under the
    48 MiB limit used below (v7x-safe); raise both on v5e/v6e (128 MiB
    physical VMEM) for even larger tiles.
    """
    per_row = 2 * 4 * (d * (K + 2) + 128)
    tm = vmem_budget_bytes // max(per_row, 1)
    tm = max(8, min(max_tm, (tm // 8) * 8))
    # Guarantee >= _MIN_PARALLEL_STEPS parallel grid steps when m allows, so
    # both v7x TensorCores get work and the zs writeback overlaps compute.
    if m >= _MIN_PARALLEL_STEPS * 8:
        tm_par = (m + _MIN_PARALLEL_STEPS - 1) // _MIN_PARALLEL_STEPS
        tm_par = ((tm_par + 7) // 8) * 8
        tm = min(tm, tm_par)
    m8 = ((m + 7) // 8) * 8
    return max(8, min(tm, m8))


def normalizing_flow_forward(x, W, U, B, *, tm=None, zs_dtype=None):
    """Pallas-backed equivalent of NormalizingFlow([PlanarFlow]*K).forward(x).

    Returns (zs, log_det_jacobian) with zs.shape == (K+1, m, d) and
    log_det_jacobian.shape == (m,), matching torch.stack(zs) and ldj.
    `zs_dtype` optionally stores the stacked states at lower precision
    (e.g. bf16) to halve the dominant HBM writeback; default keeps x.dtype.
    """
    m, d = x.shape
    K = W.shape[0]
    zs_dtype = x.dtype if zs_dtype is None else jnp.dtype(zs_dtype)

    if tm is None:
        tm = _choose_tm(m, d, K)
    tm = max(8, (tm // 8) * 8)                      # (8, 128) sublane rule
    m_pad = ((m + tm - 1) // tm) * tm
    x_p = x if m_pad == m else jnp.pad(x, ((0, m_pad - m), (0, 0)))

    # K per-flow scalars: biases and wu_k = dot(w_k, u_k), read from SMEM.
    W32 = W.astype(jnp.float32)
    U32 = U.astype(jnp.float32)
    wu = jnp.sum(W32 * U32, axis=-1)                # (K,)
    B32 = B.astype(jnp.float32).reshape(K)          # (K,)

    # Round-tripping z through the zs slab is exact only when zs is f32;
    # otherwise keep the live carry to preserve reference dtype semantics.
    reuse_slab = zs_dtype == jnp.float32
    kernel = make_normalizing_flow_kernel(K, reuse_slab)
    grid = (m_pad // tm,)

    zs, ldj = pl.pallas_call(
        kernel,
        out_shape=(
            jax.ShapeDtypeStruct((K + 1, m_pad, d), zs_dtype),
            jax.ShapeDtypeStruct((m_pad, 1), jnp.float32),
        ),
        grid=grid,
        in_specs=[
            pl.BlockSpec((tm, d), lambda i: (i, 0)),                   # x tile
            pl.BlockSpec((K, d), lambda i: (0, 0)),                    # W (resident)
            pl.BlockSpec((K, d), lambda i: (0, 0)),                    # U (resident)
            pl.BlockSpec(memory_space=pltpu.MemorySpace.SMEM),         # B scalars
            pl.BlockSpec(memory_space=pltpu.MemorySpace.SMEM),         # wu scalars
        ],
        out_specs=(
            pl.BlockSpec((K + 1, tm, d), lambda i: (0, i, 0)),         # zs slab
            pl.BlockSpec((tm, 1), lambda i: (i, 0)),                   # ldj
        ),
        compiler_params=pltpu.CompilerParams(
            dimension_semantics=("parallel",),
            vmem_limit_bytes=_VMEM_LIMIT_BYTES,
        ),
    )(x_p, W32, U32, B32, wu)

    if m_pad != m:
        zs = zs[:, :m, :]
        ldj = ldj[:m]
    return zs, ldj[:, 0]


def _reference_forward(x, W, U, B):
    """Pure-JAX reference mirroring the PyTorch loop semantics."""
    z = x
    zs = [z]
    ldj = jnp.zeros((x.shape[0],), jnp.float32)
    for k in range(W.shape[0]):
        lin = z @ W[k] + B[k]
        h = jnp.tanh(lin)
        z = z + h[:, None] * U[k][None, :]
        psi = (1.0 - h * h)[:, None] * W[k][None, :]
        ldj = ldj + jnp.log(jnp.abs(1.0 + psi @ U[k]) + 1e-8)
        zs.append(z)
    return jnp.stack(zs), ldj


if __name__ == "__main__":
    # Small shapes consistent with the module's (m, d) usage; d=128 keeps the
    # zs writeback lane-dense, m=200 exercises batch padding + a 4-step grid.
    m, d, K = 200, 128, 4

    key = jax.random.PRNGKey(0)
    kx, kw, ku, kb = jax.random.split(key, 4)
    x = jax.random.normal(kx, (m, d), dtype=jnp.float32)
    # Deterministic flow parameters (scaled so 1 + (1-h^2)*w.u stays positive).
    W = 0.1 * jax.random.normal(kw, (K, d), dtype=jnp.float32)
    U = 0.1 * jax.random.normal(ku, (K, d), dtype=jnp.float32)
    B = 0.1 * jax.random.normal(kb, (K,), dtype=jnp.float32)

    zs_ref, ldj_ref = _reference_forward(x, W, U, B)

    # Auto-tile path: _choose_tm now caps tm so the grid has >= 4 parallel steps.
    zs1, ldj1 = jax.jit(normalizing_flow_forward)(x, W, U, B)
    jax.block_until_ready((zs1, ldj1))

    # Explicit-tile path: tm=64 -> padded batch of 256, grid of 4 parallel steps.
    fwd_tiled = jax.jit(lambda a, b, c, e: normalizing_flow_forward(a, b, c, e, tm=64))
    zs2, ldj2 = fwd_tiled(x, W, U, B)
    jax.block_until_ready((zs2, ldj2))

    for zs, ldj in ((zs1, ldj1), (zs2, ldj2)):
        assert zs.shape == (K + 1, m, d) and ldj.shape == (m,)
        assert jnp.allclose(zs, zs_ref, atol=1e-4, rtol=1e-4)
        assert jnp.allclose(ldj, ldj_ref, atol=1e-4, rtol=1e-4)

    print("KERNEL_OK")
</pallas_src>

<mosaic_0001>
module attributes {stable_mosaic.version = 11 : i64} {
  func.func @kernel(%arg0: i32, %arg1: memref<56x128xf32, #tpu.memory_space<vmem>>, %arg2: memref<4x128xf32, #tpu.memory_space<vmem>>, %arg3: memref<4x128xf32, #tpu.memory_space<vmem>>, %arg4: memref<4xf32, #tpu.memory_space<smem>>, %arg5: memref<4xf32, #tpu.memory_space<smem>>, %arg6: memref<5x56x128xf32, #tpu.memory_space<vmem>>, %arg7: memref<56x1xf32, #tpu.memory_space<vmem>>) attributes {dimension_semantics = [#tpu.dimension_semantics<parallel>], iteration_bounds = array<i64: 4>, scalar_prefetch = 0 : i64, scratch_operands = 0 : i64, tpu.core_type = #tpu.core_type<tc>, window_params = [{transform_indices = @transform_0, window_bounds = array<i64: 56, 128>}, {pipeline_mode = #tpu.pipeline_mode<synchronous>, transform_indices = @transform_1, window_bounds = array<i64: 4, 128>}, {pipeline_mode = #tpu.pipeline_mode<synchronous>, transform_indices = @transform_2, window_bounds = array<i64: 4, 128>}, {transform_indices = @transform_3, window_bounds = array<i64: 4>}, {transform_indices = @transform_4, window_bounds = array<i64: 4>}, {transform_indices = @transform_5, window_bounds = array<i64: 5, 56, 128>}, {transform_indices = @transform_6, window_bounds = array<i64: 56, 1>}]} {
    %c0 = arith.constant 0 : index
    %c0_0 = arith.constant 0 : index
    %0 = vector.load %arg1[%c0, %c0_0] : memref<56x128xf32, #tpu.memory_space<vmem>>, vector<56x128xf32>
    %c0_1 = arith.constant 0 : index
    %c0_2 = arith.constant 0 : index
    %c0_3 = arith.constant 0 : index
    %1 = vector.load %arg6[%c0_1, %c0_2, %c0_3] : memref<5x56x128xf32, #tpu.memory_space<vmem>>, vector<1x56x128xf32>
    %2 = vector.shape_cast %1 : vector<1x56x128xf32> to vector<56x128xf32>
    %3 = vector.shape_cast %0 : vector<56x128xf32> to vector<1x56x128xf32>
    tpu.vector_store %arg6[%c0_1, %c0_2, %c0_3], %3 {strides = array<i32>} : memref<5x56x128xf32, #tpu.memory_space<vmem>>, vector<1x56x128xf32>,
    %cst = arith.constant 1.000000e+00 : f32
    %4 = vector.broadcast %cst : f32 to vector<56x1xf32>
    %c0_4 = arith.constant 0 : index
    %c0_5 = arith.constant 0 : index
    %c0_6 = arith.constant 0 : index
    %5 = vector.load %arg6[%c0_4, %c0_5, %c0_6] : memref<5x56x128xf32, #tpu.memory_space<vmem>>, vector<1x56x128xf32>
    %6 = vector.shape_cast %5 : vector<1x56x128xf32> to vector<56x128xf32>
    %c0_7 = arith.constant 0 : index
    %c0_8 = arith.constant 0 : index
    %7 = vector.load %arg2[%c0_7, %c0_8] : memref<4x128xf32, #tpu.memory_space<vmem>>, vector<1x128xf32>
    %c0_9 = arith.constant 0 : index
    %c0_10 = arith.constant 0 : index
    %8 = vector.load %arg3[%c0_9, %c0_10] : memref<4x128xf32, #tpu.memory_space<vmem>>, vector<1x128xf32>
    %c0_11 = arith.constant 0 : index
    %9 = memref.load %arg4[%c0_11] : memref<4xf32, #tpu.memory_space<smem>>
    %c0_12 = arith.constant 0 : index
    %10 = memref.load %arg5[%c0_12] : memref<4xf32, #tpu.memory_space<smem>>
    %11 = vector.broadcast %7 : vector<1x128xf32> to vector<56x128xf32>
    %12 = arith.mulf %6, %11 : vector<56x128xf32>
    %cst_13 = arith.constant dense<0.000000e+00> : vector<56xf32>
    %13 = vector.multi_reduction <add>, %12, %cst_13 [1] : vector<56x128xf32> to vector<56xf32>
    %14 = vector.shape_cast %13 : vector<56xf32> to vector<56x1xf32>
    %15 = vector.broadcast %9 : f32 to vector<56x1xf32>
    %16 = arith.addf %14, %15 : vector<56x1xf32>
    %17 = math.tanh %16 : vector<56x1xf32>
    %18 = vector.broadcast %17 : vector<56x1xf32> to vector<56x128xf32>
    %19 = vector.broadcast %8 : vector<1x128xf32> to vector<56x128xf32>
    %20 = arith.mulf %18, %19 : vector<56x128xf32>
    %21 = arith.addf %6, %20 : vector<56x128xf32>
    %c1 = arith.constant 1 : index
    %c0_14 = arith.constant 0 : index
    %c0_15 = arith.constant 0 : index
    %22 = vector.load %arg6[%c1, %c0_14, %c0_15] : memref<5x56x128xf32, #tpu.memory_space<vmem>>, vector<1x56x128xf32>
    %23 = vector.shape_cast %22 : vector<1x56x128xf32> to vector<56x128xf32>
    %24 = vector.shape_cast %21 : vector<56x128xf32> to vector<1x56x128xf32>
    tpu.vector_store %arg6[%c1, %c0_14, %c0_15], %24 {strides = array<i32>} : memref<5x56x128xf32, #tpu.memory_space<vmem>>, vector<1x56x128xf32>,
    %25 = arith.mulf %17, %17 : vector<56x1xf32>
    %cst_16 = arith.constant 1.000000e+00 : f32
    %26 = vector.broadcast %cst_16 : f32 to vector<56x1xf32>
    %27 = arith.subf %26, %25 : vector<56x1xf32>
    %28 = vector.broadcast %10 : f32 to vector<56x1xf32>
    %29 = arith.mulf %27, %28 : vector<56x1xf32>
    %cst_17 = arith.constant 1.000000e+00 : f32
    %30 = vector.broadcast %cst_17 : f32 to vector<56x1xf32>
    %31 = arith.addf %30, %29 : vector<56x1xf32>
    %32 = math.absf %31 : vector<56x1xf32>
    %cst_18 = arith.constant 9.99999993E-9 : f32
    %33 = vector.broadcast %cst_18 : f32 to vector<56x1xf32>
    %34 = arith.addf %32, %33 : vector<56x1xf32>
    %35 = arith.mulf %4, %34 : vector<56x1xf32>
    %c1_19 = arith.constant 1 : index
    %c0_20 = arith.constant 0 : index
    %c0_21 = arith.constant 0 : index
    %36 = vector.load %arg6[%c1_19, %c0_20, %c0_21] : memref<5x56x128xf32, #tpu.memory_space<vmem>>, vector<1x56x128xf32>
    %37 = vector.shape_cast %36 : vector<1x56x128xf32> to vector<56x128xf32>
    %c1_22 = arith.constant 1 : index
    %c0_23 = arith.constant 0 : index
    %38 = vector.load %arg2[%c1_22, %c0_23] : memref<4x128xf32, #tpu.memory_space<vmem>>, vector<1x128xf32>
    %c1_24 = arith.constant 1 : index
    %c0_25 = arith.constant 0 : index
    %39 = vector.load %arg3[%c1_24, %c0_25] : memref<4x128xf32, #tpu.memory_space<vmem>>, vector<1x128xf32>
    %c1_26 = arith.constant 1 : index
    %40 = memref.load %arg4[%c1_26] : memref<4xf32, #tpu.memory_space<smem>>
    %c1_27 = arith.constant 1 : index
    %41 = memref.load %arg5[%c1_27] : memref<4xf32, #tpu.memory_space<smem>>
    %42 = vector.broadcast %38 : vector<1x128xf32> to vector<56x128xf32>
    %43 = arith.mulf %37, %42 : vector<56x128xf32>
    %cst_28 = arith.constant dense<0.000000e+00> : vector<56xf32>
    %44 = vector.multi_reduction <add>, %43, %cst_28 [1] : vector<56x128xf32> to vector<56xf32>
    %45 = vector.shape_cast %44 : vector<56xf32> to vector<56x1xf32>
    %46 = vector.broadcast %40 : f32 to vector<56x1xf32>
    %47 = arith.addf %45, %46 : vector<56x1xf32>
    %48 = math.tanh %47 : vector<56x1xf32>
    %49 = vector.broadcast %48 : vector<56x1xf32> to vector<56x128xf32>
    %50 = vector.broadcast %39 : vector<1x128xf32> to vector<56x128xf32>
    %51 = arith.mulf %49, %50 : vector<56x128xf32>
    %52 = arith.addf %37, %51 : vector<56x128xf32>
    %c2 = arith.constant 2 : index
    %c0_29 = arith.constant 0 : index
    %c0_30 = arith.constant 0 : index
    %53 = vector.load %arg6[%c2, %c0_29, %c0_30] : memref<5x56x128xf32, #tpu.memory_space<vmem>>, vector<1x56x128xf32>
    %54 = vector.shape_cast %53 : vector<1x56x128xf32> to vector<56x128xf32>
    %55 = vector.shape_cast %52 : vector<56x128xf32> to vector<1x56x128xf32>
    tpu.vector_store %arg6[%c2, %c0_29, %c0_30], %55 {strides = array<i32>} : memref<5x56x128xf32, #tpu.memory_space<vmem>>, vector<1x56x128xf32>,
    %56 = arith.mulf %48, %48 : vector<56x1xf32>
    %cst_31 = arith.constant 1.000000e+00 : f32
    %57 = vector.broadcast %cst_31 : f32 to vector<56x1xf32>
    %58 = arith.subf %57, %56 : vector<56x1xf32>
    %59 = vector.broadcast %41 : f32 to vector<56x1xf32>
    %60 = arith.mulf %58, %59 : vector<56x1xf32>
    %cst_32 = arith.constant 1.000000e+00 : f32
    %61 = vector.broadcast %cst_32 : f32 to vector<56x1xf32>
    %62 = arith.addf %61, %60 : vector<56x1xf32>
    %63 = math.absf %62 : vector<56x1xf32>
    %cst_33 = arith.constant 9.99999993E-9 : f32
    %64 = vector.broadcast %cst_33 : f32 to vector<56x1xf32>
    %65 = arith.addf %63, %64 : vector<56x1xf32>
    %66 = arith.mulf %35, %65 : vector<56x1xf32>
    %c2_34 = arith.constant 2 : index
    %c0_35 = arith.constant 0 : index
    %c0_36 = arith.constant 0 : index
    %67 = vector.load %arg6[%c2_34, %c0_35, %c0_36] : memref<5x56x128xf32, #tpu.memory_space<vmem>>, vector<1x56x128xf32>
    %68 = vector.shape_cast %67 : vector<1x56x128xf32> to vector<56x128xf32>
    %c2_37 = arith.constant 2 : index
    %c0_38 = arith.constant 0 : index
    %69 = vector.load %arg2[%c2_37, %c0_38] : memref<4x128xf32, #tpu.memory_space<vmem>>, vector<1x128xf32>
    %c2_39 = arith.constant 2 : index
    %c0_40 = arith.constant 0 : index
    %70 = vector.load %arg3[%c2_39, %c0_40] : memref<4x128xf32, #tpu.memory_space<vmem>>, vector<1x128xf32>
    %c2_41 = arith.constant 2 : index
    %71 = memref.load %arg4[%c2_41] : memref<4xf32, #tpu.memory_space<smem>>
    %c2_42 = arith.constant 2 : index
    %72 = memref.load %arg5[%c2_42] : memref<4xf32, #tpu.memory_space<smem>>
    %73 = vector.broadcast %69 : vector<1x128xf32> to vector<56x128xf32>
    %74 = arith.mulf %68, %73 : vector<56x128xf32>
    %cst_43 = arith.constant dense<0.000000e+00> : vector<56xf32>
    %75 = vector.multi_reduction <add>, %74, %cst_43 [1] : vector<56x128xf32> to vector<56xf32>
    %76 = vector.shape_cast %75 : vector<56xf32> to vector<56x1xf32>
    %77 = vector.broadcast %71 : f32 to vector<56x1xf32>
    %78 = arith.addf %76, %77 : vector<56x1xf32>
    %79 = math.tanh %78 : vector<56x1xf32>
    %80 = vector.broadcast %79 : vector<56x1xf32> to vector<56x128xf32>
    %81 = vector.broadcast %70 : vector<1x128xf32> to vector<56x128xf32>
    %82 = arith.mulf %80, %81 : vector<56x128xf32>
    %83 = arith.addf %68, %82 : vector<56x128xf32>
    %c3 = arith.constant 3 : index
    %c0_44 = arith.constant 0 : index
    %c0_45 = arith.constant 0 : index
    %84 = vector.load %arg6[%c3, %c0_44, %c0_45] : memref<5x56x128xf32, #tpu.memory_space<vmem>>, vector<1x56x128xf32>
    %85 = vector.shape_cast %84 : vector<1x56x128xf32> to vector<56x128xf32>
    %86 = vector.shape_cast %83 : vector<56x128xf32> to vector<1x56x128xf32>
    tpu.vector_store %arg6[%c3, %c0_44, %c0_45], %86 {strides = array<i32>} : memref<5x56x128xf32, #tpu.memory_space<vmem>>, vector<1x56x128xf32>,
    %87 = arith.mulf %79, %79 : vector<56x1xf32>
    %cst_46 = arith.constant 1.000000e+00 : f32
    %88 = vector.broadcast %cst_46 : f32 to vector<56x1xf32>
    %89 = arith.subf %88, %87 : vector<56x1xf32>
    %90 = vector.broadcast %72 : f32 to vector<56x1xf32>
    %91 = arith.mulf %89, %90 : vector<56x1xf32>
    %cst_47 = arith.constant 1.000000e+00 : f32
    %92 = vector.broadcast %cst_47 : f32 to vector<56x1xf32>
    %93 = arith.addf %92, %91 : vector<56x1xf32>
    %94 = math.absf %93 : vector<56x1xf32>
    %cst_48 = arith.constant 9.99999993E-9 : f32
    %95 = vector.broadcast %cst_48 : f32 to vector<56x1xf32>
    %96 = arith.addf %94, %95 : vector<56x1xf32>
    %97 = arith.mulf %66, %96 : vector<56x1xf32>
    %c3_49 = arith.constant 3 : index
    %c0_50 = arith.constant 0 : index
    %c0_51 = arith.constant 0 : index
    %98 = vector.load %arg6[%c3_49, %c0_50, %c0_51] : memref<5x56x128xf32, #tpu.memory_space<vmem>>, vector<1x56x128xf32>
    %99 = vector.shape_cast %98 : vector<1x56x128xf32> to vector<56x128xf32>
    %c3_52 = arith.constant 3 : index
    %c0_53 = arith.constant 0 : index
    %100 = vector.load %arg2[%c3_52, %c0_53] : memref<4x128xf32, #tpu.memory_space<vmem>>, vector<1x128xf32>
    %c3_54 = arith.constant 3 : index
    %c0_55 = arith.constant 0 : index
    %101 = vector.load %arg3[%c3_54, %c0_55] : memref<4x128xf32, #tpu.memory_space<vmem>>, vector<1x128xf32>
    %c3_56 = arith.constant 3 : index
    %102 = memref.load %arg4[%c3_56] : memref<4xf32, #tpu.memory_space<smem>>
    %c3_57 = arith.constant 3 : index
    %103 = memref.load %arg5[%c3_57] : memref<4xf32, #tpu.memory_space<smem>>
    %104 = vector.broadcast %100 : vector<1x128xf32> to vector<56x128xf32>
    %105 = arith.mulf %99, %104 : vector<56x128xf32>
    %cst_58 = arith.constant dense<0.000000e+00> : vector<56xf32>
    %106 = vector.multi_reduction <add>, %105, %cst_58 [1] : vector<56x128xf32> to vector<56xf32>
    %107 = vector.shape_cast %106 : vector<56xf32> to vector<56x1xf32>
    %108 = vector.broadcast %102 : f32 to vector<56x1xf32>
    %109 = arith.addf %107, %108 : vector<56x1xf32>
    %110 = math.tanh %109 : vector<56x1xf32>
    %111 = vector.broadcast %110 : vector<56x1xf32> to vector<56x128xf32>
    %112 = vector.broadcast %101 : vector<1x128xf32> to vector<56x128xf32>
    %113 = arith.mulf %111, %112 : vector<56x128xf32>
    %114 = arith.addf %99, %113 : vector<56x128xf32>
    %c4 = arith.constant 4 : index
    %c0_59 = arith.constant 0 : index
    %c0_60 = arith.constant 0 : index
    %115 = vector.load %arg6[%c4, %c0_59, %c0_60] : memref<5x56x128xf32, #tpu.memory_space<vmem>>, vector<1x56x128xf32>
    %116 = vector.shape_cast %115 : vector<1x56x128xf32> to vector<56x128xf32>
    %117 = vector.shape_cast %114 : vector<56x128xf32> to vector<1x56x128xf32>
    tpu.vector_store %arg6[%c4, %c0_59, %c0_60], %117 {strides = array<i32>} : memref<5x56x128xf32, #tpu.memory_space<vmem>>, vector<1x56x128xf32>,
    %118 = arith.mulf %110, %110 : vector<56x1xf32>
    %cst_61 = arith.constant 1.000000e+00 : f32
    %119 = vector.broadcast %cst_61 : f32 to vector<56x1xf32>
    %120 = arith.subf %119, %118 : vector<56x1xf32>
    %121 = vector.broadcast %103 : f32 to vector<56x1xf32>
    %122 = arith.mulf %120, %121 : vector<56x1xf32>
    %cst_62 = arith.constant 1.000000e+00 : f32
    %123 = vector.broadcast %cst_62 : f32 to vector<56x1xf32>
    %124 = arith.addf %123, %122 : vector<56x1xf32>
    %125 = math.absf %124 : vector<56x1xf32>
    %cst_63 = arith.constant 9.99999993E-9 : f32
    %126 = vector.broadcast %cst_63 : f32 to vector<56x1xf32>
    %127 = arith.addf %125, %126 : vector<56x1xf32>
    %128 = arith.mulf %97, %127 : vector<56x1xf32>
    %129 = math.log %128 : vector<56x1xf32>
    %c0_64 = arith.constant 0 : index
    %c0_65 = arith.constant 0 : index
    %130 = vector.load %arg7[%c0_64, %c0_65] : memref<56x1xf32, #tpu.memory_space<vmem>>, vector<56x1xf32>
    tpu.vector_store %arg7[%c0_64, %c0_65], %129 {strides = array<i32>} : memref<56x1xf32, #tpu.memory_space<vmem>>, vector<56x1xf32>,
    return
  }
  func.func @transform_0(%arg0: i32) -> (i32, i32) {
    %c0_i32 = arith.constant 0 : i32
    %c0_i32_0 = arith.constant 0 : i32
    return %arg0, %c0_i32 : i32, i32
  }
  func.func @transform_1(%arg0: i32) -> (i32, i32) {
    %c0_i32 = arith.constant 0 : i32
    %c0_i32_0 = arith.constant 0 : i32
    %c0_i32_1 = arith.constant 0 : i32
    return %c0_i32, %c0_i32_0 : i32, i32
  }
  func.func @transform_2(%arg0: i32) -> (i32, i32) {
    %c0_i32 = arith.constant 0 : i32
    %c0_i32_0 = arith.constant 0 : i32
    %c0_i32_1 = arith.constant 0 : i32
    return %c0_i32, %c0_i32_0 : i32, i32
  }
  func.func @transform_3(%arg0: i32) -> i32 {
    %c0_i32 = arith.constant 0 : i32
    %c0_i32_0 = arith.constant 0 : i32
    return %c0_i32 : i32
  }
  func.func @transform_4(%arg0: i32) -> i32 {
    %c0_i32 = arith.constant 0 : i32
    %c0_i32_0 = arith.constant 0 : i32
    return %c0_i32 : i32
  }
  func.func @transform_5(%arg0: i32) -> (i32, i32, i32) {
    %c0_i32 = arith.constant 0 : i32
    %c0_i32_0 = arith.constant 0 : i32
    %c0_i32_1 = arith.constant 0 : i32
    return %c0_i32, %arg0, %c0_i32_0 : i32, i32, i32
  }
  func.func @transform_6(%arg0: i32) -> (i32, i32) {
    %c0_i32 = arith.constant 0 : i32
    %c0_i32_0 = arith.constant 0 : i32
    return %arg0, %c0_i32 : i32, i32
  }
}

</mosaic_0001>

<llo_original>
// kernel: normalizing_flow_forward.1
$region0: #{normalizing_flow_forward.1}
  #allocation0 [shape = 'u32[]', space=smem, size = 0x4, offset = 0x4, fixed_abs, tag = 'smem constant byte address 0x4 - core index']
  #allocation1 [shape = 'u32[144,128]{1,0:T(1,128)}', space=vmem, size = 0x12000, scoped, tag = 'internal scratch']
  %s0 = inlined_call_operand.vmem [shape: f32[224,128], index: 0, kind: input, shape index: {}]
  %s1 = inlined_call_operand.vmem [shape: f32[4,128], index: 1, kind: input, shape index: {}]
  %s2 = inlined_call_operand.vmem [shape: f32[4,128], index: 2, kind: input, shape index: {}]
  %s3 = inlined_call_operand.vmem [shape: f32[4], index: 3, kind: input, shape index: {}]
  %s4 = inlined_call_operand.vmem [shape: f32[4], index: 4, kind: input, shape index: {}]
  %s5 = inlined_call_operand.vmem [shape: f32[5,224,128], index: 5, kind: output, shape index: {0}]
  %s6 = inlined_call_operand.vmem [shape: f32[224,1], index: 6, kind: output, shape index: {1}]
  %7 = xla_tuple %s5, %s6
  %s8 = sld [smem:[#allocation0]]
  $region103: #{normalizing_flow_forward.1} parent=0
    _
  %s10 = ssub.s32 1, %s8
  %s11 = scalar_select 0, %s10, %s8
  $region1: #{normalizing_flow_forward.1} parent=0
    #allocation2 [shape = 'u8[512]{0}', space=smem, size = 0x200, scoped, tag = 'input window, operand 3, single buffered']
    #allocation3 [shape = 's32[2]{0}', space=sflag, size = 0x8, scoped, tag = 'scoped memory for normalizing_flow_forward.1']
    #allocation4 [shape = 'u8[512]{0}', space=smem, size = 0x200, scoped, tag = 'input window, operand 4, single buffered']
    #allocation5 [shape = 's32[1]{0}', space=sflag, size = 0x4, scoped, tag = 'scoped memory for normalizing_flow_forward.1']
    #allocation6 [shape = 'u8[286720]{0}', space=vmem, size = 0x46000, scoped, tag = 'output window, operand 0']
    %12 = vsyncpa [#allocation3], 0
    %13 = vsyncpa [#allocation5], 0
    loop: start=0, step=1, limit=6
    $region2: #{normalizing_flow_forward.1} parent=1 // loop_pre_header
      _
    $region3: #{normalizing_flow_forward.1} parent=1 // loop_header
      %s15 = sphi 0, %s19
      %p16 = scmp.ge.s32.totalorder %s15, 6
      %s25 = sphi 0, %s27
      %s28 = sphi 0, %s25
      %s29 = sphi 0, %s28
      %s45 = sphi 0, %s29
      %s49 = sphi 0, %s49
      %s51 = sphi 0, %s49
      %s52 = sphi 0, %s51
      %s66 = sphi 0, %s52
      %s70 = sphi 0, %s70
      %s72 = sphi 0, %s70
      %s73 = sphi 0, %s72
      %s87 = sphi 0, %s73
      %s91 = sphi 0, %s91
      %s93 = sphi 0, %s91
      %s94 = sphi 0, %s93
      %s108 = sphi 0, %s94
      %s112 = sphi 0, %s112
      %s114 = sphi 0, %s112
      %s115 = sphi 0, %s114
      %s129 = sphi 0, %s115
      %s135 = sphi 0, %s137
      %s138 = sphi 0, %s135
      %s139 = sphi 0, %s138
      %s155 = sphi 0, %s139
      %s161 = sphi 0, %s163
      %s164 = sphi 0, %s161
      %s165 = sphi 0, %s164
      %s181 = sphi 0, %s165
    $region4: #{normalizing_flow_forward.1} parent=1 // loop_header_branch
      %18 = sbr.rel (%p16) target = $region8
    $region5: #{normalizing_flow_forward.1} parent=1 // loop_body
      %s20 = ssub.s32 %s15, 1
      %s21 = ssub.s32 %s15, 2
      %s22 = sadd.s32 %s15, 1
      %s23 = ssub.s32 %s15, %s22
      %p24 = scmp.eq.s32.totalorder %s23, 0
      %s26 = sadd.s32 %s25, 1
      %s27 = scalar_select %p24, %s25, %s26
      %p30 = pneg %p24
      %p31 = scmp.eq.s32.totalorder %s15, 3
      %p32 = por %p30, %p31
      %p33 = scmp.ne.s32.totalorder %s25, %s28
      %p34 = scmp.eq.s32.totalorder %s15, 0
      %p35 = por %p33, %p34
      %p36 = scmp.ne.s32.totalorder %s25, %s28
      %p37 = scmp.eq.s32.totalorder %s20, 3
      %p38 = por %p36, %p37
      %p39 = scmp.ne.s32.totalorder %s28, %s29
      %p40 = scmp.eq.s32.totalorder %s20, 0
      %p41 = por %p39, %p40
      %p42 = scmp.ne.s32.totalorder %s28, %s29
      %p43 = scmp.eq.s32.totalorder %s21, 3
      %p44 = por %p42, %p43
      %p46 = scmp.ne.s32.totalorder %s29, %s45
      %p47 = scmp.eq.s32.totalorder %s21, 0
      %p48 = por %p46, %p47
      %s50 = sadd.s32 %s49, 1
      %p53 = scmp.eq.s32.totalorder %s15, 3
      %p54 = scmp.ne.s32.totalorder %s49, %s51
      %p55 = scmp.eq.s32.totalorder %s15, 0
      %p56 = por %p54, %p55
      %p57 = scmp.ne.s32.totalorder %s49, %s51
      %p58 = scmp.eq.s32.totalorder %s20, 3
      %p59 = por %p57, %p58
      %p60 = scmp.ne.s32.totalorder %s51, %s52
      %p61 = scmp.eq.s32.totalorder %s20, 0
      %p62 = por %p60, %p61
      %p63 = scmp.ne.s32.totalorder %s51, %s52
      %p64 = scmp.eq.s32.totalorder %s21, 3
      %p65 = por %p63, %p64
      %p67 = scmp.ne.s32.totalorder %s52, %s66
      %p68 = scmp.eq.s32.totalorder %s21, 0
      %p69 = por %p67, %p68
      %s71 = sadd.s32 %s70, 1
      %p74 = scmp.eq.s32.totalorder %s15, 3
      %p75 = scmp.ne.s32.totalorder %s70, %s72
      %p76 = scmp.eq.s32.totalorder %s15, 0
      %p77 = por %p75, %p76
      %p78 = scmp.ne.s32.totalorder %s70, %s72
      %p79 = scmp.eq.s32.totalorder %s20, 3
      %p80 = por %p78, %p79
      %p81 = scmp.ne.s32.totalorder %s72, %s73
      %p82 = scmp.eq.s32.totalorder %s20, 0
      %p83 = por %p81, %p82
      %p84 = scmp.ne.s32.totalorder %s72, %s73
      %p85 = scmp.eq.s32.totalorder %s21, 3
      %p86 = por %p84, %p85
      %p88 = scmp.ne.s32.totalorder %s73, %s87
      %p89 = scmp.eq.s32.totalorder %s21, 0
      %p90 = por %p88, %p89
      %s92 = sadd.s32 %s91, 1
      %p95 = scmp.eq.s32.totalorder %s15, 3
      %p96 = scmp.ne.s32.totalorder %s91, %s93
      %p97 = scmp.eq.s32.totalorder %s15, 0
      %p98 = por %p96, %p97
      %p99 = scmp.ne.s32.totalorder %s91, %s93
      %p100 = scmp.eq.s32.totalorder %s20, 3
      %p101 = por %p99, %p100
      %p102 = scmp.ne.s32.totalorder %s93, %s94
      %p103 = scmp.eq.s32.totalorder %s20, 0
      %p104 = por %p102, %p103
      %p105 = scmp.ne.s32.totalorder %s93, %s94
      %p106 = scmp.eq.s32.totalorder %s21, 3
      %p107 = por %p105, %p106
      %p109 = scmp.ne.s32.totalorder %s94, %s108
      %p110 = scmp.eq.s32.totalorder %s21, 0
      %p111 = por %p109, %p110
      %s113 = sadd.s32 %s112, 1
      %p116 = scmp.eq.s32.totalorder %s15, 3
      %p117 = scmp.ne.s32.totalorder %s112, %s114
      %p118 = scmp.eq.s32.totalorder %s15, 0
      %p119 = por %p117, %p118
      %p120 = scmp.ne.s32.totalorder %s112, %s114
      %p121 = scmp.eq.s32.totalorder %s20, 3
      %p122 = por %p120, %p121
      %p123 = scmp.ne.s32.totalorder %s114, %s115
      %p124 = scmp.eq.s32.totalorder %s20, 0
      %p125 = por %p123, %p124
      %p126 = scmp.ne.s32.totalorder %s114, %s115
      %p127 = scmp.eq.s32.totalorder %s21, 3
      %p128 = por %p126, %p127
      %p130 = scmp.ne.s32.totalorder %s115, %s129
      %p131 = scmp.eq.s32.totalorder %s21, 0
      %p132 = por %p130, %p131
      %s133 = ssub.s32 %s15, %s22
      %p134 = scmp.eq.s32.totalorder %s133, 0
      %s136 = sadd.s32 %s135, 1
      %s137 = scalar_select %p134, %s135, %s136
      %p140 = pneg %p134
      %p141 = scmp.eq.s32.totalorder %s15, 3
      %p142 = por %p140, %p141
      %p143 = scmp.ne.s32.totalorder %s135, %s138
      %p144 = scmp.eq.s32.totalorder %s15, 0
      %p145 = por %p143, %p144
      %p146 = scmp.ne.s32.totalorder %s135, %s138
      %p147 = scmp.eq.s32.totalorder %s20, 3
      %p148 = por %p146, %p147
      %p149 = scmp.ne.s32.totalorder %s138, %s139
      %p150 = scmp.eq.s32.totalorder %s20, 0
      %p151 = por %p149, %p150
      %p152 = scmp.ne.s32.totalorder %s138, %s139
      %p153 = scmp.eq.s32.totalorder %s21, 3
      %p154 = por %p152, %p153
      %p156 = scmp.ne.s32.totalorder %s139, %s155
      %p157 = scmp.eq.s32.totalorder %s21, 0
      %p158 = por %p156, %p157
      %s159 = ssub.s32 %s15, %s22
      %p160 = scmp.eq.s32.totalorder %s159, 0
      %s162 = sadd.s32 %s161, 1
      %s163 = scalar_select %p160, %s161, %s162
      %p166 = pneg %p160
      %p167 = scmp.eq.s32.totalorder %s15, 3
      %p168 = por %p166, %p167
      %p169 = scmp.ne.s32.totalorder %s161, %s164
      %p170 = scmp.eq.s32.totalorder %s15, 0
      %p171 = por %p169, %p170
      %p172 = scmp.ne.s32.totalorder %s161, %s164
      %p173 = scmp.eq.s32.totalorder %s20, 3
      %p174 = por %p172, %p173
      %p175 = scmp.ne.s32.totalorder %s164, %s165
      %p176 = scmp.eq.s32.totalorder %s20, 0
      %p177 = por %p175, %p176
      %p178 = scmp.ne.s32.totalorder %s164, %s165
      %p179 = scmp.eq.s32.totalorder %s21, 3
      %p180 = por %p178, %p179
      %p182 = scmp.ne.s32.totalorder %s165, %s181
      %p183 = scmp.eq.s32.totalorder %s21, 0
      %p184 = por %p182, %p183
      %p185 = scmp.le.s32.totalorder 1, %s15
      %p186 = scmp.lt.s32.totalorder %s15, 5
      %p187 = pnand %p185, %p186
      %p188 = pneg %p187
      // Predicated region
      $region9: #{normalizing_flow_forward.1} parent=5 // pred_check
        _
      $region10: #{normalizing_flow_forward.1} parent=5 // pred_check_branch
        %190 = sbr.rel (%p187) target = $region12
      $region11: #{normalizing_flow_forward.1} parent=5 // pred_region
        %s191 = ssub.s32 %s15, 1
        // Predicated region
        $region13: #{normalizing_flow_forward.1} parent=11 // pred_check
          %p192 = pneg %p62
        $region14: #{normalizing_flow_forward.1} parent=11 // pred_check_branch
          %194 = sbr.rel (%p192) target = $region16
        $region15: #{normalizing_flow_forward.1} parent=11 // pred_region
          _
        $region16: #{normalizing_flow_forward.1} parent=11 // pred_fallthru
          _
        // Predicated region
        $region17: #{normalizing_flow_forward.1} parent=11 // pred_check
          %p195 = pneg %p83
        $region18: #{normalizing_flow_forward.1} parent=11 // pred_check_branch
          %197 = sbr.rel (%p195) target = $region20
        $region19: #{normalizing_flow_forward.1} parent=11 // pred_region
          _
        $region20: #{normalizing_flow_forward.1} parent=11 // pred_fallthru
          _
        // Predicated region
        $region21: #{normalizing_flow_forward.1} parent=11 // pred_check
          %p198 = pneg %p104
        $region22: #{normalizing_flow_forward.1} parent=11 // pred_check_branch
          %200 = sbr.rel (%p198) target = $region24
        $region23: #{normalizing_flow_forward.1} parent=11 // pred_region
          %s202 = ssub.s32 16, 16
          %203 = vsyncadd [#allocation3], %s202
          %s205 = sshll.u32 %s3, 4
          %s206 = int_to_ptr.vmem [resolvable:$true] %s205
          %208 = dma.vmem_to_smem %s206, 16, [#allocation2], [#allocation3]
        $region24: #{normalizing_flow_forward.1} parent=11 // pred_fallthru
          _
        // Predicated region
        $region25: #{normalizing_flow_forward.1} parent=11 // pred_check
          %p209 = pneg %p125
        $region26: #{normalizing_flow_forward.1} parent=11 // pred_check_branch
          %211 = sbr.rel (%p209) target = $region28
        $region27: #{normalizing_flow_forward.1} parent=11 // pred_region
          %s213 = ssub.s32 16, 16
          %214 = vsyncadd [#allocation5], %s213
          %s216 = sshll.u32 %s4, 4
          %s217 = int_to_ptr.vmem [resolvable:$true] %s216
          %219 = dma.vmem_to_smem %s217, 16, [#allocation4], [#allocation5]
        $region28: #{normalizing_flow_forward.1} parent=11 // pred_fallthru
          _
      $region12: #{normalizing_flow_forward.1} parent=5 // pred_fallthru
        _
      %p220 = scmp.lt.s32.totalorder %s15, 4
      // Predicated region
      $region29: #{normalizing_flow_forward.1} parent=5 // pred_check
        %p221 = pneg %p220
      $region30: #{normalizing_flow_forward.1} parent=5 // pred_check_branch
        %223 = sbr.rel (%p221) target = $region32
      $region31: #{normalizing_flow_forward.1} parent=5 // pred_region
        // Predicated region
        $region33: #{normalizing_flow_forward.1} parent=31 // pred_check
          %p224 = pneg %p35
        $region34: #{normalizing_flow_forward.1} parent=31 // pred_check_branch
          %226 = sbr.rel (%p224) target = $region36
        $region35: #{normalizing_flow_forward.1} parent=31 // pred_region
          %s227 = smul.u32 7, %s15
          %p228 = scmp.lt.s32.totalorder %s227, 27
          %s229 = scalar_select %p228, %s227, 27
          %s230 = smul.addr %s229, 8
          %s231 = scalar_lea.vmem %s0, %s230
          %s232 = smul.u32 7, %s15
        $region36: #{normalizing_flow_forward.1} parent=31 // pred_fallthru
          _
      $region32: #{normalizing_flow_forward.1} parent=5 // pred_fallthru
        _
      %p233 = scmp.le.s32.totalorder 1, %s15
      %p234 = scmp.lt.s32.totalorder %s15, 5
      %p235 = pnand %p233, %p234
      %p236 = pneg %p235
      // Predicated region
      $region37: #{normalizing_flow_forward.1} parent=5 // pred_check
        _
      $region38: #{normalizing_flow_forward.1} parent=5 // pred_check_branch
        %238 = sbr.rel (%p235) target = $region40
      $region39: #{normalizing_flow_forward.1} parent=5 // pred_region
        %s239 = ssub.s32 %s15, 1
        // Predicated region
        $region41: #{normalizing_flow_forward.1} parent=39 // pred_check
          %p240 = pneg %p104
        $region42: #{normalizing_flow_forward.1} parent=39 // pred_check_branch
          %242 = sbr.rel (%p240) target = $region44
        $region43: #{normalizing_flow_forward.1} parent=39 // pred_region
          %243 = dma.done [#allocation3], 16
        $region44: #{normalizing_flow_forward.1} parent=39 // pred_fallthru
          _
        // Predicated region
        $region45: #{normalizing_flow_forward.1} parent=39 // pred_check
          %p244 = pneg %p125
        $region46: #{normalizing_flow_forward.1} parent=39 // pred_check_branch
          %246 = sbr.rel (%p244) target = $region48
        $region47: #{normalizing_flow_forward.1} parent=39 // pred_region
          %247 = dma.done [#allocation5], 16
        $region48: #{normalizing_flow_forward.1} parent=39 // pred_fallthru
          _
        %248 = sfence
        %s249 = smul.u32 7, %s20
        %p250 = scmp.lt.s32.totalorder %s249, 27
        %s251 = scalar_select %p250, %s249, 27
        %s252 = smul.addr %s251, 8
        %s253 = scalar_lea.vmem %s0, %s252
        %p254 = pneg %p41
        %p255 = pneg %p38
        %p256 = pneg %p62
        %p257 = pneg %p59
        %p258 = pneg %p83
        %p259 = pneg %p80
        %p260 = pneg %p104
        %p261 = pneg %p101
        %p262 = pneg %p125
        %p263 = pneg %p122
        %p264 = pneg %p151
        %p265 = pneg %p148
        %s266 = sand.u32 %s138, 1
        %s267 = sand.u32 %s138, 1
        %s268 = smul.addr %s267, 280
        %s269 = scalar_lea.vmem [#allocation6], %s268
        %p270 = pneg %p177
        %p271 = pneg %p174
        %s272 = smul.u32 7, %s20
        %p273 = scmp.lt.s32.totalorder %s272, 27
        %s274 = scalar_select %p273, %s272, 27
        %s275 = smul.addr %s274, 8
        %s276 = scalar_lea.vmem %s6, %s275
        %s277 = smul.u32 7, %s20
        %p278 = scmp.lt.s32.totalorder %s277, 27
        %s279 = scalar_select %p278, %s277, 27
        %s280 = smul.addr %s279, 8
        %s281 = scalar_lea.vmem %s0, %s280
        %s282 = smul.u32 7, %s20
        %s283 = smul.u32 7, %s20
        %s284 = smul.u32 7, %s20
        %p285 = scmp.lt.s32.totalorder %s284, 27
        %s286 = scalar_select %p285, %s284, 27
        %s287 = smul.addr %s286, 8
        %s288 = scalar_lea.vmem %s6, %s287
        %s289 = smul.u32 7, %s20
        %v290 = vld [vmem:[%s281] sm:$0xff]
        %v291 = vld [vmem:[%s281 + $0x8] sm:$0xff]
        %v292 = vld [vmem:[%s281 + $0x10] sm:$0xff]
        %v293 = vld [vmem:[%s281 + $0x18] sm:$0xff]
        %v294 = vld [vmem:[%s281 + $0x20] sm:$0xff]
        %v295 = vld [vmem:[%s281 + $0x28] sm:$0xff]
        %v296 = vld [vmem:[%s281 + $0x30] sm:$0xff]
        %297 = vst [vmem:[%s269] sm:$0xff] %v290
        %298 = vst [vmem:[%s269 + $0x8] sm:$0xff] %v291
        %299 = vst [vmem:[%s269 + $0x10] sm:$0xff] %v292
        %300 = vst [vmem:[%s269 + $0x18] sm:$0xff] %v293
        %301 = vst [vmem:[%s269 + $0x20] sm:$0xff] %v294
        %302 = vst [vmem:[%s269 + $0x28] sm:$0xff] %v295
        %303 = vst [vmem:[%s269 + $0x30] sm:$0xff] %v296
        %v304 = vld [vmem:[%s269] sm:$0xff]
        %v305 = vld [vmem:[%s269 + $0x8] sm:$0xff]
        %v306 = vld [vmem:[%s269 + $0x10] sm:$0xff]
        %v307 = vld [vmem:[%s269 + $0x18] sm:$0xff]
        %v308 = vld [vmem:[%s269 + $0x20] sm:$0xff]
        %v309 = vld [vmem:[%s269 + $0x28] sm:$0xff]
        %v310 = vld [vmem:[%s269 + $0x30] sm:$0xff]
        %v311 = vld [vmem:[%s1] sm:$0x1]
        %v312 = vld [vmem:[%s2] sm:$0x1]
        %s313 = sld [smem:[#allocation2]]
        %s314 = sld [smem:[#allocation4]]
        %v315 = vlaneseq
        %v316 = vshrl.u32 %v315, 7
        %v317 = vsub.s32 0, %v316
        %v318 = vrot.slane %v311, %v317
        %v319 = vmul.f32 %v304, %v318
        %v320 = vmul.f32 %v305, %v318
        %v321 = vmul.f32 %v306, %v318
        %v322 = vmul.f32 %v307, %v318
        %v323 = vmul.f32 %v308, %v318
        %v324 = vmul.f32 %v309, %v318
        %v325 = vmul.f32 %v310, %v318
        %326 = vadd.xlane.f32.xlu0 %v319
        %v327 = vpop.xlane.xlu0 %326
        %328 = vadd.xlane.f32.xlu0 %v320
        %v329 = vpop.xlane.xlu0 %328
        %330 = vadd.xlane.f32.xlu0 %v321
        %v331 = vpop.xlane.xlu0 %330
        %332 = vadd.xlane.f32.xlu0 %v322
        %v333 = vpop.xlane.xlu0 %332
        %334 = vadd.xlane.f32.xlu0 %v323
        %v335 = vpop.xlane.xlu0 %334
        %336 = vadd.xlane.f32.xlu0 %v324
        %v337 = vpop.xlane.xlu0 %336
        %338 = vadd.xlane.f32.xlu0 %v325
        %v339 = vpop.xlane.xlu0 %338
        %v340 = vstv %s313
        %v341 = vadd.f32 %v327, %v340
        %v342 = vadd.f32 %v329, %v340
        %v343 = vadd.f32 %v331, %v340
        %v344 = vadd.f32 %v333, %v340
        %v345 = vadd.f32 %v335, %v340
        %v346 = vadd.f32 %v337, %v340
        %v347 = vadd.f32 %v339, %v340
        %v348 = vtanh.pop %v341
        %v349 = vtanh.pop %v342
        %v350 = vtanh.pop %v343
        %v351 = vtanh.pop %v344
        %v352 = vtanh.pop %v345
        %v353 = vtanh.pop %v346
        %v354 = vtanh.pop %v347
        %v355 = vlaneseq
        %v356 = vshrl.u32 %v355, 7
        %v357 = vsub.s32 0, %v356
        %v358 = vrot.slane %v312, %v357
        %v359 = vmul.f32 %v348, %v358
        %v360 = vmul.f32 %v349, %v358
        %v361 = vmul.f32 %v350, %v358
        %v362 = vmul.f32 %v351, %v358
        %v363 = vmul.f32 %v352, %v358
        %v364 = vmul.f32 %v353, %v358
        %v365 = vmul.f32 %v354, %v358
        %v366 = vadd.f32 %v304, %v359
        %v367 = vadd.f32 %v305, %v360
        %v368 = vadd.f32 %v306, %v361
        %v369 = vadd.f32 %v307, %v362
        %v370 = vadd.f32 %v308, %v363
        %v371 = vadd.f32 %v309, %v364
        %v372 = vadd.f32 %v310, %v365
        %s373 = scalar_lea.vmem %s269, 56 [#allocation6]
        %374 = vst [vmem:[%s373] sm:$0xff] %v366
        %375 = vst [vmem:[%s373 + $0x8] sm:$0xff] %v367
        %376 = vst [vmem:[%s373 + $0x10] sm:$0xff] %v368
        %377 = vst [vmem:[%s373 + $0x18] sm:$0xff] %v369
        %378 = vst [vmem:[%s373 + $0x20] sm:$0xff] %v370
        %379 = vst [vmem:[%s373 + $0x28] sm:$0xff] %v371
        %380 = vst [vmem:[%s373 + $0x30] sm:$0xff] %v372
        %v381 = vmul.f32 %v348, %v348
        %v382 = vmul.f32 %v349, %v349
        %v383 = vmul.f32 %v350, %v350
        %v384 = vmul.f32 %v351, %v351
        %v385 = vmul.f32 %v352, %v352
        %v386 = vmul.f32 %v353, %v353
        %v387 = vmul.f32 %v354, %v354
        %v388 = vsub.f32 1.0, %v381
        %v389 = vsub.f32 1.0, %v382
        %v390 = vsub.f32 1.0, %v383
        %v391 = vsub.f32 1.0, %v384
        %v392 = vsub.f32 1.0, %v385
        %v393 = vsub.f32 1.0, %v386
        %v394 = vsub.f32 1.0, %v387
        %v395 = vstv %s314
        %v396 = vmul.f32 %v388, %v395
        %v397 = vmul.f32 %v389, %v395
        %v398 = vmul.f32 %v390, %v395
        %v399 = vmul.f32 %v391, %v395
        %v400 = vmul.f32 %v392, %v395
        %v401 = vmul.f32 %v393, %v395
        %v402 = vmul.f32 %v394, %v395
        %v403 = vadd.f32 %v396, 1.0
        %v404 = vadd.f32 %v397, 1.0
        %v405 = vadd.f32 %v398, 1.0
        %v406 = vadd.f32 %v399, 1.0
        %v407 = vadd.f32 %v400, 1.0
        %v408 = vadd.f32 %v401, 1.0
        %v409 = vadd.f32 %v402, 1.0
        %v410 = vand.u32 2147483647, %v403
        %v411 = vand.u32 2147483647, %v404
        %v412 = vand.u32 2147483647, %v405
        %v413 = vand.u32 2147483647, %v406
        %v414 = vand.u32 2147483647, %v407
        %v415 = vand.u32 2147483647, %v408
        %v416 = vand.u32 2147483647, %v409
        %v417 = vadd.f32 %v410, 1e-08
        %v418 = vadd.f32 %v411, 1e-08
        %v419 = vadd.f32 %v412, 1e-08
        %v420 = vadd.f32 %v413, 1e-08
        %v421 = vadd.f32 %v414, 1e-08
        %v422 = vadd.f32 %v415, 1e-08
        %v423 = vadd.f32 %v416, 1e-08
        %v424 = vld [vmem:[%s373] sm:$0xff]
        %v425 = vld [vmem:[%s373 + $0x8] sm:$0xff]
        %v426 = vld [vmem:[%s373 + $0x10] sm:$0xff]
        %v427 = vld [vmem:[%s373 + $0x18] sm:$0xff]
        %v428 = vld [vmem:[%s373 + $0x20] sm:$0xff]
        %v429 = vld [vmem:[%s373 + $0x28] sm:$0xff]
        %v430 = vld [vmem:[%s373 + $0x30] sm:$0xff]
        %v431 = vld [vmem:[%s1 + $0x1] sm:$0x1]
        %v432 = vld [vmem:[%s2 + $0x1] sm:$0x1]
        %s433 = sld [smem:[#allocation2 + $0x1]]
        %s434 = sld [smem:[#allocation4 + $0x1]]
        %v435 = vlaneseq
        %v436 = vshrl.u32 %v435, 7
        %v437 = vsub.s32 0, %v436
        %v438 = vrot.slane %v431, %v437
        %v439 = vmul.f32 %v424, %v438
        %v440 = vmul.f32 %v425, %v438
        %v441 = vmul.f32 %v426, %v438
        %v442 = vmul.f32 %v427, %v438
        %v443 = vmul.f32 %v428, %v438
        %v444 = vmul.f32 %v429, %v438
        %v445 = vmul.f32 %v430, %v438
        %446 = vadd.xlane.f32.xlu0 %v439
        %v447 = vpop.xlane.xlu0 %446
        %448 = vadd.xlane.f32.xlu0 %v440
        %v449 = vpop.xlane.xlu0 %448
        %450 = vadd.xlane.f32.xlu0 %v441
        %v451 = vpop.xlane.xlu0 %450
        %452 = vadd.xlane.f32.xlu0 %v442
        %v453 = vpop.xlane.xlu0 %452
        %454 = vadd.xlane.f32.xlu0 %v443
        %v455 = vpop.xlane.xlu0 %454
        %456 = vadd.xlane.f32.xlu0 %v444
        %v457 = vpop.xlane.xlu0 %456
        %458 = vadd.xlane.f32.xlu0 %v445
        %v459 = vpop.xlane.xlu0 %458
        %v460 = vstv %s433
        %v461 = vadd.f32 %v447, %v460
        %v462 = vadd.f32 %v449, %v460
        %v463 = vadd.f32 %v451, %v460
        %v464 = vadd.f32 %v453, %v460
        %v465 = vadd.f32 %v455, %v460
        %v466 = vadd.f32 %v457, %v460
        %v467 = vadd.f32 %v459, %v460
        %v468 = vtanh.pop %v461
        %v469 = vtanh.pop %v462
        %v470 = vtanh.pop %v463
        %v471 = vtanh.pop %v464
        %v472 = vtanh.pop %v465
        %v473 = vtanh.pop %v466
        %v474 = vtanh.pop %v467
        %v475 = vlaneseq
        %v476 = vshrl.u32 %v475, 7
        %v477 = vsub.s32 0, %v476
        %v478 = vrot.slane %v432, %v477
        %v479 = vmul.f32 %v468, %v478
        %v480 = vmul.f32 %v469, %v478
        %v481 = vmul.f32 %v470, %v478
        %v482 = vmul.f32 %v471, %v478
        %v483 = vmul.f32 %v472, %v478
        %v484 = vmul.f32 %v473, %v478
        %v485 = vmul.f32 %v474, %v478
        %v486 = vadd.f32 %v424, %v479
        %v487 = vadd.f32 %v425, %v480
        %v488 = vadd.f32 %v426, %v481
        %v489 = vadd.f32 %v427, %v482
        %v490 = vadd.f32 %v428, %v483
        %v491 = vadd.f32 %v429, %v484
        %v492 = vadd.f32 %v430, %v485
        %s493 = scalar_lea.vmem %s269, 112 [#allocation6]
        %494 = vst [vmem:[%s493] sm:$0xff] %v486
        %495 = vst [vmem:[%s493 + $0x8] sm:$0xff] %v487
        %496 = vst [vmem:[%s493 + $0x10] sm:$0xff] %v488
        %497 = vst [vmem:[%s493 + $0x18] sm:$0xff] %v489
        %498 = vst [vmem:[%s493 + $0x20] sm:$0xff] %v490
        %499 = vst [vmem:[%s493 + $0x28] sm:$0xff] %v491
        %500 = vst [vmem:[%s493 + $0x30] sm:$0xff] %v492
        %v501 = vmul.f32 %v468, %v468
        %v502 = vmul.f32 %v469, %v469
        %v503 = vmul.f32 %v470, %v470
        %v504 = vmul.f32 %v471, %v471
        %v505 = vmul.f32 %v472, %v472
        %v506 = vmul.f32 %v473, %v473
        %v507 = vmul.f32 %v474, %v474
        %v508 = vsub.f32 1.0, %v501
        %v509 = vsub.f32 1.0, %v502
        %v510 = vsub.f32 1.0, %v503
        %v511 = vsub.f32 1.0, %v504
        %v512 = vsub.f32 1.0, %v505
        %v513 = vsub.f32 1.0, %v506
        %v514 = vsub.f32 1.0, %v507
        %v515 = vstv %s434
        %v516 = vmul.f32 %v508, %v515
        %v517 = vmul.f32 %v509, %v515
        %v518 = vmul.f32 %v510, %v515
        %v519 = vmul.f32 %v511, %v515
        %v520 = vmul.f32 %v512, %v515
        %v521 = vmul.f32 %v513, %v515
        %v522 = vmul.f32 %v514, %v515
        %v523 = vadd.f32 %v516, 1.0
        %v524 = vadd.f32 %v517, 1.0
        %v525 = vadd.f32 %v518, 1.0
        %v526 = vadd.f32 %v519, 1.0
        %v527 = vadd.f32 %v520, 1.0
        %v528 = vadd.f32 %v521, 1.0
        %v529 = vadd.f32 %v522, 1.0
        %v530 = vand.u32 2147483647, %v523
        %v531 = vand.u32 2147483647, %v524
        %v532 = vand.u32 2147483647, %v525
        %v533 = vand.u32 2147483647, %v526
        %v534 = vand.u32 2147483647, %v527
        %v535 = vand.u32 2147483647, %v528
        %v536 = vand.u32 2147483647, %v529
        %v537 = vadd.f32 %v530, 1e-08
        %v538 = vadd.f32 %v531, 1e-08
        %v539 = vadd.f32 %v532, 1e-08
        %v540 = vadd.f32 %v533, 1e-08
        %v541 = vadd.f32 %v534, 1e-08
        %v542 = vadd.f32 %v535, 1e-08
        %v543 = vadd.f32 %v536, 1e-08
        %v544 = vmul.f32 %v417, %v537
        %v545 = vmul.f32 %v418, %v538
        %v546 = vmul.f32 %v419, %v539
        %v547 = vmul.f32 %v420, %v540
        %v548 = vmul.f32 %v421, %v541
        %v549 = vmul.f32 %v422, %v542
        %v550 = vmul.f32 %v423, %v543
        %v551 = vld [vmem:[%s493] sm:$0xff]
        %v552 = vld [vmem:[%s493 + $0x8] sm:$0xff]
        %v553 = vld [vmem:[%s493 + $0x10] sm:$0xff]
        %v554 = vld [vmem:[%s493 + $0x18] sm:$0xff]
        %v555 = vld [vmem:[%s493 + $0x20] sm:$0xff]
        %v556 = vld [vmem:[%s493 + $0x28] sm:$0xff]
        %v557 = vld [vmem:[%s493 + $0x30] sm:$0xff]
        %v558 = vld [vmem:[%s1 + $0x2] sm:$0x1]
        %v559 = vld [vmem:[%s2 + $0x2] sm:$0x1]
        %s560 = sld [smem:[#allocation2 + $0x2]]
        %s561 = sld [smem:[#allocation4 + $0x2]]
        %v562 = vlaneseq
        %v563 = vshrl.u32 %v562, 7
        %v564 = vsub.s32 0, %v563
        %v565 = vrot.slane %v558, %v564
        %v566 = vmul.f32 %v551, %v565
        %v567 = vmul.f32 %v552, %v565
        %v568 = vmul.f32 %v553, %v565
        %v569 = vmul.f32 %v554, %v565
        %v570 = vmul.f32 %v555, %v565
        %v571 = vmul.f32 %v556, %v565
        %v572 = vmul.f32 %v557, %v565
        %573 = vadd.xlane.f32.xlu0 %v566
        %v574 = vpop.xlane.xlu0 %573
        %575 = vadd.xlane.f32.xlu0 %v567
        %v576 = vpop.xlane.xlu0 %575
        %577 = vadd.xlane.f32.xlu0 %v568
        %v578 = vpop.xlane.xlu0 %577
        %579 = vadd.xlane.f32.xlu0 %v569
        %v580 = vpop.xlane.xlu0 %579
        %581 = vadd.xlane.f32.xlu0 %v570
        %v582 = vpop.xlane.xlu0 %581
        %583 = vadd.xlane.f32.xlu0 %v571
        %v584 = vpop.xlane.xlu0 %583
        %585 = vadd.xlane.f32.xlu0 %v572
        %v586 = vpop.xlane.xlu0 %585
        %v587 = vstv %s560
        %v588 = vadd.f32 %v574, %v587
        %v589 = vadd.f32 %v576, %v587
        %v590 = vadd.f32 %v578, %v587
        %v591 = vadd.f32 %v580, %v587
        %v592 = vadd.f32 %v582, %v587
        %v593 = vadd.f32 %v584, %v587
        %v594 = vadd.f32 %v586, %v587
        %v595 = vtanh.pop %v588
        %v596 = vtanh.pop %v589
        %v597 = vtanh.pop %v590
        %v598 = vtanh.pop %v591
        %v599 = vtanh.pop %v592
        %v600 = vtanh.pop %v593
        %v601 = vtanh.pop %v594
        %v602 = vlaneseq
        %v603 = vshrl.u32 %v602, 7
        %v604 = vsub.s32 0, %v603
        %v605 = vrot.slane %v559, %v604
        %v606 = vmul.f32 %v595, %v605
        %v607 = vmul.f32 %v596, %v605
        %v608 = vmul.f32 %v597, %v605
        %v609 = vmul.f32 %v598, %v605
        %v610 = vmul.f32 %v599, %v605
        %v611 = vmul.f32 %v600, %v605
        %v612 = vmul.f32 %v601, %v605
        %v613 = vadd.f32 %v551, %v606
        %v614 = vadd.f32 %v552, %v607
        %v615 = vadd.f32 %v553, %v608
        %v616 = vadd.f32 %v554, %v609
        %v617 = vadd.f32 %v555, %v610
        %v618 = vadd.f32 %v556, %v611
        %v619 = vadd.f32 %v557, %v612
        %s620 = scalar_lea.vmem %s269, 168 [#allocation6]
        %621 = vst [vmem:[%s620] sm:$0xff] %v613
        %622 = vst [vmem:[%s620 + $0x8] sm:$0xff] %v614
        %623 = vst [vmem:[%s620 + $0x10] sm:$0xff] %v615
        %624 = vst [vmem:[%s620 + $0x18] sm:$0xff] %v616
        %625 = vst [vmem:[%s620 + $0x20] sm:$0xff] %v617
        %626 = vst [vmem:[%s620 + $0x28] sm:$0xff] %v618
        %627 = vst [vmem:[%s620 + $0x30] sm:$0xff] %v619
        %v628 = vmul.f32 %v595, %v595
        %v629 = vmul.f32 %v596, %v596
        %v630 = vmul.f32 %v597, %v597
        %v631 = vmul.f32 %v598, %v598
        %v632 = vmul.f32 %v599, %v599
        %v633 = vmul.f32 %v600, %v600
        %v634 = vmul.f32 %v601, %v601
        %v635 = vsub.f32 1.0, %v628
        %v636 = vsub.f32 1.0, %v629
        %v637 = vsub.f32 1.0, %v630
        %v638 = vsub.f32 1.0, %v631
        %v639 = vsub.f32 1.0, %v632
        %v640 = vsub.f32 1.0, %v633
        %v641 = vsub.f32 1.0, %v634
        %v642 = vstv %s561
        %v643 = vmul.f32 %v635, %v642
        %v644 = vmul.f32 %v636, %v642
        %v645 = vmul.f32 %v637, %v642
        %v646 = vmul.f32 %v638, %v642
        %v647 = vmul.f32 %v639, %v642
        %v648 = vmul.f32 %v640, %v642
        %v649 = vmul.f32 %v641, %v642
        %v650 = vadd.f32 %v643, 1.0
        %v651 = vadd.f32 %v644, 1.0
        %v652 = vadd.f32 %v645, 1.0
        %v653 = vadd.f32 %v646, 1.0
        %v654 = vadd.f32 %v647, 1.0
        %v655 = vadd.f32 %v648, 1.0
        %v656 = vadd.f32 %v649, 1.0
        %v657 = vand.u32 2147483647, %v650
        %v658 = vand.u32 2147483647, %v651
        %v659 = vand.u32 2147483647, %v652
        %v660 = vand.u32 2147483647, %v653
        %v661 = vand.u32 2147483647, %v654
        %v662 = vand.u32 2147483647, %v655
        %v663 = vand.u32 2147483647, %v656
        %v664 = vadd.f32 %v657, 1e-08
        %v665 = vadd.f32 %v658, 1e-08
        %v666 = vadd.f32 %v659, 1e-08
        %v667 = vadd.f32 %v660, 1e-08
        %v668 = vadd.f32 %v661, 1e-08
        %v669 = vadd.f32 %v662, 1e-08
        %v670 = vadd.f32 %v663, 1e-08
        %v671 = vmul.f32 %v544, %v664
        %v672 = vmul.f32 %v545, %v665
        %v673 = vmul.f32 %v546, %v666
        %v674 = vmul.f32 %v547, %v667
        %v675 = vmul.f32 %v548, %v668
        %v676 = vmul.f32 %v549, %v669
        %v677 = vmul.f32 %v550, %v670
        %v678 = vld [vmem:[%s620] sm:$0xff]
        %v679 = vld [vmem:[%s620 + $0x8] sm:$0xff]
        %v680 = vld [vmem:[%s620 + $0x10] sm:$0xff]
        %v681 = vld [vmem:[%s620 + $0x18] sm:$0xff]
        %v682 = vld [vmem:[%s620 + $0x20] sm:$0xff]
        %v683 = vld [vmem:[%s620 + $0x28] sm:$0xff]
        %v684 = vld [vmem:[%s620 + $0x30] sm:$0xff]
        %v685 = vld [vmem:[%s1 + $0x3] sm:$0x1]
        %v686 = vld [vmem:[%s2 + $0x3] sm:$0x1]
        %s687 = sld [smem:[#allocation2 + $0x3]]
        %s688 = sld [smem:[#allocation4 + $0x3]]
        %v689 = vlaneseq
        %v690 = vshrl.u32 %v689, 7
        %v691 = vsub.s32 0, %v690
        %v692 = vrot.slane %v685, %v691
        %v693 = vmul.f32 %v678, %v692
        %v694 = vmul.f32 %v679, %v692
        %v695 = vmul.f32 %v680, %v692
        %v696 = vmul.f32 %v681, %v692
        %v697 = vmul.f32 %v682, %v692
        %v698 = vmul.f32 %v683, %v692
        %v699 = vmul.f32 %v684, %v692
        %700 = vadd.xlane.f32.xlu0 %v693
        %v701 = vpop.xlane.xlu0 %700
        %702 = vadd.xlane.f32.xlu0 %v694
        %v703 = vpop.xlane.xlu0 %702
        %704 = vadd.xlane.f32.xlu0 %v695
        %v705 = vpop.xlane.xlu0 %704
        %706 = vadd.xlane.f32.xlu0 %v696
        %v707 = vpop.xlane.xlu0 %706
        %708 = vadd.xlane.f32.xlu0 %v697
        %v709 = vpop.xlane.xlu0 %708
        %710 = vadd.xlane.f32.xlu0 %v698
        %v711 = vpop.xlane.xlu0 %710
        %712 = vadd.xlane.f32.xlu0 %v699
        %v713 = vpop.xlane.xlu0 %712
        %v714 = vstv %s687
        %v715 = vadd.f32 %v701, %v714
        %v716 = vadd.f32 %v703, %v714
        %v717 = vadd.f32 %v705, %v714
        %v718 = vadd.f32 %v707, %v714
        %v719 = vadd.f32 %v709, %v714
        %v720 = vadd.f32 %v711, %v714
        %v721 = vadd.f32 %v713, %v714
        %v722 = vtanh.pop %v715
        %v723 = vtanh.pop %v716
        %v724 = vtanh.pop %v717
        %v725 = vtanh.pop %v718
        %v726 = vtanh.pop %v719
        %v727 = vtanh.pop %v720
        %v728 = vtanh.pop %v721
        %v729 = vlaneseq
        %v730 = vshrl.u32 %v729, 7
        %v731 = vsub.s32 0, %v730
        %v732 = vrot.slane %v686, %v731
        %v733 = vmul.f32 %v722, %v732
        %v734 = vmul.f32 %v723, %v732
        %v735 = vmul.f32 %v724, %v732
        %v736 = vmul.f32 %v725, %v732
        %v737 = vmul.f32 %v726, %v732
        %v738 = vmul.f32 %v727, %v732
        %v739 = vmul.f32 %v728, %v732
        %v740 = vadd.f32 %v678, %v733
        %v741 = vadd.f32 %v679, %v734
        %v742 = vadd.f32 %v680, %v735
        %v743 = vadd.f32 %v681, %v736
        %v744 = vadd.f32 %v682, %v737
        %v745 = vadd.f32 %v683, %v738
        %v746 = vadd.f32 %v684, %v739
        %s747 = scalar_lea.vmem %s269, 224 [#allocation6]
        %748 = vst [vmem:[%s747] sm:$0xff] %v740
        %749 = vst [vmem:[%s747 + $0x8] sm:$0xff] %v741
        %750 = vst [vmem:[%s747 + $0x10] sm:$0xff] %v742
        %751 = vst [vmem:[%s747 + $0x18] sm:$0xff] %v743
        %752 = vst [vmem:[%s747 + $0x20] sm:$0xff] %v744
        %753 = vst [vmem:[%s747 + $0x28] sm:$0xff] %v745
        %754 = vst [vmem:[%s747 + $0x30] sm:$0xff] %v746
        %v755 = vmul.f32 %v722, %v722
        %v756 = vmul.f32 %v723, %v723
        %v757 = vmul.f32 %v724, %v724
        %v758 = vmul.f32 %v725, %v725
        %v759 = vmul.f32 %v726, %v726
        %v760 = vmul.f32 %v727, %v727
        %v761 = vmul.f32 %v728, %v728
        %v762 = vsub.f32 1.0, %v755
        %v763 = vsub.f32 1.0, %v756
        %v764 = vsub.f32 1.0, %v757
        %v765 = vsub.f32 1.0, %v758
        %v766 = vsub.f32 1.0, %v759
        %v767 = vsub.f32 1.0, %v760
        %v768 = vsub.f32 1.0, %v761
        %v769 = vstv %s688
        %v770 = vmul.f32 %v762, %v769
        %v771 = vmul.f32 %v763, %v769
        %v772 = vmul.f32 %v764, %v769
        %v773 = vmul.f32 %v765, %v769
        %v774 = vmul.f32 %v766, %v769
        %v775 = vmul.f32 %v767, %v769
        %v776 = vmul.f32 %v768, %v769
        %v777 = vadd.f32 %v770, 1.0
        %v778 = vadd.f32 %v771, 1.0
        %v779 = vadd.f32 %v772, 1.0
        %v780 = vadd.f32 %v773, 1.0
        %v781 = vadd.f32 %v774, 1.0
        %v782 = vadd.f32 %v775, 1.0
        %v783 = vadd.f32 %v776, 1.0
        %v784 = vand.u32 2147483647, %v777
        %v785 = vand.u32 2147483647, %v778
        %v786 = vand.u32 2147483647, %v779
        %v787 = vand.u32 2147483647, %v780
        %v788 = vand.u32 2147483647, %v781
        %v789 = vand.u32 2147483647, %v782
        %v790 = vand.u32 2147483647, %v783
        %v791 = vadd.f32 %v784, 1e-08
        %v792 = vadd.f32 %v785, 1e-08
        %v793 = vadd.f32 %v786, 1e-08
        %v794 = vadd.f32 %v787, 1e-08
        %v795 = vadd.f32 %v788, 1e-08
        %v796 = vadd.f32 %v789, 1e-08
        %v797 = vadd.f32 %v790, 1e-08
        %v798 = vmul.f32 %v671, %v791
        %v799 = vmul.f32 %v672, %v792
        %v800 = vmul.f32 %v673, %v793
        %v801 = vmul.f32 %v674, %v794
        %v802 = vmul.f32 %v675, %v795
        %v803 = vmul.f32 %v676, %v796
        %v804 = vmul.f32 %v677, %v797
        %v805 = vlog2.pop %v798
        %v806 = vmul.f32 %v805, 0.6931472
        %v807 = vlog2.pop %v799
        %v808 = vmul.f32 %v807, 0.6931472
        %v809 = vlog2.pop %v800
        %v810 = vmul.f32 %v809, 0.6931472
        %v811 = vlog2.pop %v801
        %v812 = vmul.f32 %v811, 0.6931472
        %v813 = vlog2.pop %v802
        %v814 = vmul.f32 %v813, 0.6931472
        %v815 = vlog2.pop %v803
        %v816 = vmul.f32 %v815, 0.6931472
        %v817 = vlog2.pop %v804
        %v818 = vmul.f32 %v817, 0.6931472
        %vm819 = vcmask 7168
        %820 = vst.msk [vmem:[%s288] sm:$0xff] %vm819, %v806
        %821 = vst.msk [vmem:[%s288 + $0x8] sm:$0xff] %vm819, %v808
        %822 = vst.msk [vmem:[%s288 + $0x10] sm:$0xff] %vm819, %v810
        %823 = vst.msk [vmem:[%s288 + $0x18] sm:$0xff] %vm819, %v812
        %824 = vst.msk [vmem:[%s288 + $0x20] sm:$0xff] %vm819, %v814
        %825 = vst.msk [vmem:[%s288 + $0x28] sm:$0xff] %vm819, %v816
        %826 = vst.msk [vmem:[%s288 + $0x30] sm:$0xff] %vm819, %v818
        %s827 = sand.u32 %s138, 1
        %s828 = sand.u32 %s138, 1
        %s829 = smul.addr %s828, 280
        %s830 = scalar_lea.vmem [#allocation6], %s829
        %s831 = smul.u32 7, %s20
        %p832 = scmp.lt.s32.totalorder %s831, 27
        %s833 = scalar_select %p832, %s831, 27
        %s834 = smul.addr %s833, 8
        %s835 = scalar_lea.vmem %s6, %s834
        // Predicated region
        $region49: #{normalizing_flow_forward.1} parent=39 // pred_check
          %p836 = pneg %p148
        $region50: #{normalizing_flow_forward.1} parent=39 // pred_check_branch
          %838 = sbr.rel (%p836) target = $region52
        $region51: #{normalizing_flow_forward.1} parent=39 // pred_region
          %s839 = smul.u32 7, %s20
          %s840 = smul.addr %s839, 8
          %s841 = scalar_lea.vmem %s5, %s840
          // Predicated region
          $region53: #{normalizing_flow_forward.1} parent=51 // pred_check
            _
          $region54: #{normalizing_flow_forward.1} parent=51 // pred_check_branch
            %843 = sbr.rel (0) target = $region56
          $region55: #{normalizing_flow_forward.1} parent=51 // pred_region
            // Predicated region
            $region57: #{normalizing_flow_forward.1} parent=55 // pred_check
              _
            $region58: #{normalizing_flow_forward.1} parent=55 // pred_check_branch
              %845 = sbr.rel (0) target = $region60
            $region59: #{normalizing_flow_forward.1} parent=55 // pred_region
              // Predicated region
              $region72: #{normalizing_flow_forward.1} parent=59 // pred_check
                _
              $region73: #{normalizing_flow_forward.1} parent=59 // pred_check_branch
                %929 = sbr.rel (0) target = $region75
              $region74: #{normalizing_flow_forward.1} parent=59 // pred_region
                loop: start=0, step=1, limit=1
                $region76: #{normalizing_flow_forward.1} parent=74 // loop_pre_header
                  _
                $region77: #{normalizing_flow_forward.1} parent=74 // loop_header
                  %s931 = sphi 0, %s935
                  %p932 = scmp.ge.s32.totalorder %s931, 1
                  %s936 = sphi %s830, %s830
                  %s937 = sphi %s841, %s841
                $region78: #{normalizing_flow_forward.1} parent=74 // loop_header_branch
                  %934 = sbr.rel (%p932) target = $region82
                $region79: #{normalizing_flow_forward.1} parent=74 // loop_body
                  %v938 = vld [vmem:[%s936] sm:$0xff]
                  %939 = vst [vmem:[%s937] sm:$0xff] %v938
                  %v940 = vld [vmem:[%s936 + $0x8] sm:$0xff]
                  %941 = vst [vmem:[%s937 + $0x8] sm:$0xff] %v940
                  %v942 = vld [vmem:[%s936 + $0x10] sm:$0xff]
                  %943 = vst [vmem:[%s937 + $0x10] sm:$0xff] %v942
                  %v944 = vld [vmem:[%s936 + $0x18] sm:$0xff]
                  %945 = vst [vmem:[%s937 + $0x18] sm:$0xff] %v944
                  %v946 = vld [vmem:[%s936 + $0x20] sm:$0xff]
                  %947 = vst [vmem:[%s937 + $0x20] sm:$0xff] %v946
                  %v948 = vld [vmem:[%s936 + $0x28] sm:$0xff]
                  %949 = vst [vmem:[%s937 + $0x28] sm:$0xff] %v948
                  %v950 = vld [vmem:[%s936 + $0x30] sm:$0xff]
                  %951 = vst [vmem:[%s937 + $0x30] sm:$0xff] %v950
                  %v952 = vld [vmem:[%s936 + $0x38] sm:$0xff]
                  %953 = vst [vmem:[%s937 + $0xe0] sm:$0xff] %v952
                  %v954 = vld [vmem:[%s936 + $0x40] sm:$0xff]
                  %955 = vst [vmem:[%s937 + $0xe8] sm:$0xff] %v954
                  %v956 = vld [vmem:[%s936 + $0x48] sm:$0xff]
                  %957 = vst [vmem:[%s937 + $0xf0] sm:$0xff] %v956
                  %v958 = vld [vmem:[%s936 + $0x50] sm:$0xff]
                  %959 = vst [vmem:[%s937 + $0xf8] sm:$0xff] %v958
                  %v960 = vld [vmem:[%s936 + $0x58] sm:$0xff]
                  %961 = vst [vmem:[%s937 + $0x100] sm:$0xff] %v960
                  %v962 = vld [vmem:[%s936 + $0x60] sm:$0xff]
                  %963 = vst [vmem:[%s937 + $0x108] sm:$0xff] %v962
                  %v964 = vld [vmem:[%s936 + $0x68] sm:$0xff]
                  %965 = vst [vmem:[%s937 + $0x110] sm:$0xff] %v964
                  %v966 = vld [vmem:[%s936 + $0x70] sm:$0xff]
                  %967 = vst [vmem:[%s937 + $0x1c0] sm:$0xff] %v966
                  %v968 = vld [vmem:[%s936 + $0x78] sm:$0xff]
                  %969 = vst [vmem:[%s937 + $0x1c8] sm:$0xff] %v968
                  %v970 = vld [vmem:[%s936 + $0x80] sm:$0xff]
                  %971 = vst [vmem:[%s937 + $0x1d0] sm:$0xff] %v970
                  %v972 = vld [vmem:[%s936 + $0x88] sm:$0xff]
                  %973 = vst [vmem:[%s937 + $0x1d8] sm:$0xff] %v972
                  %v974 = vld [vmem:[%s936 + $0x90] sm:$0xff]
                  %975 = vst [vmem:[%s937 + $0x1e0] sm:$0xff] %v974
                  %v976 = vld [vmem:[%s936 + $0x98] sm:$0xff]
                  %977 = vst [vmem:[%s937 + $0x1e8] sm:$0xff] %v976
                  %v978 = vld [vmem:[%s936 + $0xa0] sm:$0xff]
                  %979 = vst [vmem:[%s937 + $0x1f0] sm:$0xff] %v978
                  %v980 = vld [vmem:[%s936 + $0xa8] sm:$0xff]
                  %981 = vst [vmem:[%s937 + $0x2a0] sm:$0xff] %v980
                  %v982 = vld [vmem:[%s936 + $0xb0] sm:$0xff]
                  %983 = vst [vmem:[%s937 + $0x2a8] sm:$0xff] %v982
                  %v984 = vld [vmem:[%s936 + $0xb8] sm:$0xff]
                  %985 = vst [vmem:[%s937 + $0x2b0] sm:$0xff] %v984
                  %v986 = vld [vmem:[%s936 + $0xc0] sm:$0xff]
                  %987 = vst [vmem:[%s937 + $0x2b8] sm:$0xff] %v986
                  %v988 = vld [vmem:[%s936 + $0xc8] sm:$0xff]
                  %989 = vst [vmem:[%s937 + $0x2c0] sm:$0xff] %v988
                  %v990 = vld [vmem:[%s936 + $0xd0] sm:$0xff]
                  %991 = vst [vmem:[%s937 + $0x2c8] sm:$0xff] %v990
                  %v992 = vld [vmem:[%s936 + $0xd8] sm:$0xff]
                  %993 = vst [vmem:[%s937 + $0x2d0] sm:$0xff] %v992
                  %v994 = vld [vmem:[%s936 + $0xe0] sm:$0xff]
                  %995 = vst [vmem:[%s937 + $0x380] sm:$0xff] %v994
                  %v996 = vld [vmem:[%s936 + $0xe8] sm:$0xff]
                  %997 = vst [vmem:[%s937 + $0x388] sm:$0xff] %v996
                  %v998 = vld [vmem:[%s936 + $0xf0] sm:$0xff]
                  %999 = vst [vmem:[%s937 + $0x390] sm:$0xff] %v998
                  %v1000 = vld [vmem:[%s936 + $0xf8] sm:$0xff]
                  %1001 = vst [vmem:[%s937 + $0x398] sm:$0xff] %v1000
                  %v1002 = vld [vmem:[%s936 + $0x100] sm:$0xff]
                  %1003 = vst [vmem:[%s937 + $0x3a0] sm:$0xff] %v1002
                  %v1004 = vld [vmem:[%s936 + $0x108] sm:$0xff]
                  %1005 = vst [vmem:[%s937 + $0x3a8] sm:$0xff] %v1004
                  %v1006 = vld [vmem:[%s936 + $0x110] sm:$0xff]
                  %1007 = vst [vmem:[%s937 + $0x3b0] sm:$0xff] %v1006
                $region80: #{normalizing_flow_forward.1} parent=74 // loop_footer
                  %s935 = sadd.s32 1, %s931
                $region81: #{normalizing_flow_forward.1} parent=74 // loop_footer_branch
                  %930 = sbr.rel target = $region77
                $region82: #{normalizing_flow_forward.1} parent=74 // loop_exit
                  _
              $region75: #{normalizing_flow_forward.1} parent=59 // pred_fallthru
                _
              // Predicated region
              $region83: #{normalizing_flow_forward.1} parent=59 // pred_check
                _
              $region84: #{normalizing_flow_forward.1} parent=59 // pred_check_branch
                %1009 = sbr.rel target = $region86
              $region85: #{normalizing_flow_forward.1} parent=59 // pred_region
                _
              $region86: #{normalizing_flow_forward.1} parent=59 // pred_fallthru
                _
            $region60: #{normalizing_flow_forward.1} parent=55 // pred_fallthru
              _
            // Predicated region
            $region61: #{normalizing_flow_forward.1} parent=55 // pred_check
              _
            $region62: #{normalizing_flow_forward.1} parent=55 // pred_check_branch
              %847 = sbr.rel target = $region64
            $region63: #{normalizing_flow_forward.1} parent=55 // pred_region
              %s849 = ssub.s32 256, 1
              loop: start=0, step=1, limit=1
              $region65: #{normalizing_flow_forward.1} parent=63 // loop_pre_header
                _
              $region66: #{normalizing_flow_forward.1} parent=63 // loop_header
                %s851 = sphi 0, %s855
                %p852 = scmp.ge.s32.totalorder %s851, 1
                %s856 = sphi %s830, %s830
                %s857 = sphi %s841, %s841
              $region67: #{normalizing_flow_forward.1} parent=63 // loop_header_branch
                %854 = sbr.rel (%p852) target = $region71
              $region68: #{normalizing_flow_forward.1} parent=63 // loop_body
                %v858 = vld [vmem:[%s856] sm:%s849]
                %859 = vst [vmem:[%s857] sm:%s849] %v858
                %v860 = vld [vmem:[%s856 + $0x8] sm:%s849]
                %861 = vst [vmem:[%s857 + $0x8] sm:%s849] %v860
                %v862 = vld [vmem:[%s856 + $0x10] sm:%s849]
                %863 = vst [vmem:[%s857 + $0x10] sm:%s849] %v862
                %v864 = vld [vmem:[%s856 + $0x18] sm:%s849]
                %865 = vst [vmem:[%s857 + $0x18] sm:%s849] %v864
                %v866 = vld [vmem:[%s856 + $0x20] sm:%s849]
                %867 = vst [vmem:[%s857 + $0x20] sm:%s849] %v866
                %v868 = vld [vmem:[%s856 + $0x28] sm:%s849]
                %869 = vst [vmem:[%s857 + $0x28] sm:%s849] %v868
                %v870 = vld [vmem:[%s856 + $0x30] sm:%s849]
                %871 = vst [vmem:[%s857 + $0x30] sm:%s849] %v870
                %v872 = vld [vmem:[%s856 + $0x38] sm:%s849]
                %873 = vst [vmem:[%s857 + $0xe0] sm:%s849] %v872
                %v874 = vld [vmem:[%s856 + $0x40] sm:%s849]
                %875 = vst [vmem:[%s857 + $0xe8] sm:%s849] %v874
                %v876 = vld [vmem:[%s856 + $0x48] sm:%s849]
                %877 = vst [vmem:[%s857 + $0xf0] sm:%s849] %v876
                %v878 = vld [vmem:[%s856 + $0x50] sm:%s849]
                %879 = vst [vmem:[%s857 + $0xf8] sm:%s849] %v878
                %v880 = vld [vmem:[%s856 + $0x58] sm:%s849]
                %881 = vst [vmem:[%s857 + $0x100] sm:%s849] %v880
                %v882 = vld [vmem:[%s856 + $0x60] sm:%s849]
                %883 = vst [vmem:[%s857 + $0x108] sm:%s849] %v882
                %v884 = vld [vmem:[%s856 + $0x68] sm:%s849]
                %885 = vst [vmem:[%s857 + $0x110] sm:%s849] %v884
                %v886 = vld [vmem:[%s856 + $0x70] sm:%s849]
                %887 = vst [vmem:[%s857 + $0x1c0] sm:%s849] %v886
                %v888 = vld [vmem:[%s856 + $0x78] sm:%s849]
                %889 = vst [vmem:[%s857 + $0x1c8] sm:%s849] %v888
                %v890 = vld [vmem:[%s856 + $0x80] sm:%s849]
                %891 = vst [vmem:[%s857 + $0x1d0] sm:%s849] %v890
                %v892 = vld [vmem:[%s856 + $0x88] sm:%s849]
                %893 = vst [vmem:[%s857 + $0x1d8] sm:%s849] %v892
                %v894 = vld [vmem:[%s856 + $0x90] sm:%s849]
                %895 = vst [vmem:[%s857 + $0x1e0] sm:%s849] %v894
                %v896 = vld [vmem:[%s856 + $0x98] sm:%s849]
                %897 = vst [vmem:[%s857 + $0x1e8] sm:%s849] %v896
                %v898 = vld [vmem:[%s856 + $0xa0] sm:%s849]
                %899 = vst [vmem:[%s857 + $0x1f0] sm:%s849] %v898
                %v900 = vld [vmem:[%s856 + $0xa8] sm:%s849]
                %901 = vst [vmem:[%s857 + $0x2a0] sm:%s849] %v900
                %v902 = vld [vmem:[%s856 + $0xb0] sm:%s849]
                %903 = vst [vmem:[%s857 + $0x2a8] sm:%s849] %v902
                %v904 = vld [vmem:[%s856 + $0xb8] sm:%s849]
                %905 = vst [vmem:[%s857 + $0x2b0] sm:%s849] %v904
                %v906 = vld [vmem:[%s856 + $0xc0] sm:%s849]
                %907 = vst [vmem:[%s857 + $0x2b8] sm:%s849] %v906
                %v908 = vld [vmem:[%s856 + $0xc8] sm:%s849]
                %909 = vst [vmem:[%s857 + $0x2c0] sm:%s849] %v908
                %v910 = vld [vmem:[%s856 + $0xd0] sm:%s849]
                %911 = vst [vmem:[%s857 + $0x2c8] sm:%s849] %v910
                %v912 = vld [vmem:[%s856 + $0xd8] sm:%s849]
                %913 = vst [vmem:[%s857 + $0x2d0] sm:%s849] %v912
                %v914 = vld [vmem:[%s856 + $0xe0] sm:%s849]
                %915 = vst [vmem:[%s857 + $0x380] sm:%s849] %v914
                %v916 = vld [vmem:[%s856 + $0xe8] sm:%s849]
                %917 = vst [vmem:[%s857 + $0x388] sm:%s849] %v916
                %v918 = vld [vmem:[%s856 + $0xf0] sm:%s849]
                %919 = vst [vmem:[%s857 + $0x390] sm:%s849] %v918
                %v920 = vld [vmem:[%s856 + $0xf8] sm:%s849]
                %921 = vst [vmem:[%s857 + $0x398] sm:%s849] %v920
                %v922 = vld [vmem:[%s856 + $0x100] sm:%s849]
                %923 = vst [vmem:[%s857 + $0x3a0] sm:%s849] %v922
                %v924 = vld [vmem:[%s856 + $0x108] sm:%s849]
                %925 = vst [vmem:[%s857 + $0x3a8] sm:%s849] %v924
                %v926 = vld [vmem:[%s856 + $0x110] sm:%s849]
                %927 = vst [vmem:[%s857 + $0x3b0] sm:%s849] %v926
              $region69: #{normalizing_flow_forward.1} parent=63 // loop_footer
                %s855 = sadd.s32 1, %s851
              $region70: #{normalizing_flow_forward.1} parent=63 // loop_footer_branch
                %850 = sbr.rel target = $region66
              $region71: #{normalizing_flow_forward.1} parent=63 // loop_exit
                _
            $region64: #{normalizing_flow_forward.1} parent=55 // pred_fallthru
              _
          $region56: #{normalizing_flow_forward.1} parent=51 // pred_fallthru
            _
          %1010 = vnop
        $region52: #{normalizing_flow_forward.1} parent=39 // pred_fallthru
          _
        // Predicated region
        $region87: #{normalizing_flow_forward.1} parent=39 // pred_check
          %p1011 = pneg %p174
        $region88: #{normalizing_flow_forward.1} parent=39 // pred_check_branch
          %1013 = sbr.rel (%p1011) target = $region90
        $region89: #{normalizing_flow_forward.1} parent=39 // pred_region
          %s1014 = smul.u32 7, %s20
        $region90: #{normalizing_flow_forward.1} parent=39 // pred_fallthru
          _
      $region40: #{normalizing_flow_forward.1} parent=5 // pred_fallthru
        _
      %p1015 = scmp.le.s32.totalorder 2, %s15
      // Predicated region
      $region91: #{normalizing_flow_forward.1} parent=5 // pred_check
        %p1016 = pneg %p1015
      $region92: #{normalizing_flow_forward.1} parent=5 // pred_check_branch
        %1018 = sbr.rel (%p1016) target = $region94
      $region93: #{normalizing_flow_forward.1} parent=5 // pred_region
        %s1019 = ssub.s32 %s15, 2
        // Predicated region
        $region95: #{normalizing_flow_forward.1} parent=93 // pred_check
          %p1020 = pneg %p154
        $region96: #{normalizing_flow_forward.1} parent=93 // pred_check_branch
          %1022 = sbr.rel (%p1020) target = $region98
        $region97: #{normalizing_flow_forward.1} parent=93 // pred_region
          %s1023 = sand.u32 %s139, 1
          %s1024 = sand.u32 %s139, 1
          %s1025 = smul.addr %s1024, 280
          %s1026 = scalar_lea.vmem [#allocation6], %s1025
        $region98: #{normalizing_flow_forward.1} parent=93 // pred_fallthru
          _
        // Predicated region
        $region99: #{normalizing_flow_forward.1} parent=93 // pred_check
          %p1027 = pneg %p180
        $region100: #{normalizing_flow_forward.1} parent=93 // pred_check_branch
          %1029 = sbr.rel (%p1027) target = $region102
        $region101: #{normalizing_flow_forward.1} parent=93 // pred_region
          %s1030 = smul.u32 7, %s21
          %p1031 = scmp.lt.s32.totalorder %s1030, 27
          %s1032 = scalar_select %p1031, %s1030, 27
          %s1033 = smul.addr %s1032, 8
          %s1034 = scalar_lea.vmem %s6, %s1033
        $region102: #{normalizing_flow_forward.1} parent=93 // pred_fallthru
          _
      $region94: #{normalizing_flow_forward.1} parent=5 // pred_fallthru
        _
    $region6: #{normalizing_flow_forward.1} parent=1 // loop_footer
      %s19 = sadd.s32 1, %s15
    $region7: #{normalizing_flow_forward.1} parent=1 // loop_footer_branch
      %14 = sbr.rel target = $region3
    $region8: #{normalizing_flow_forward.1} parent=1 // loop_exit
      _
    %1035 = vsyncpa [#allocation3], 1
    %s1036 = scalar_lea.sflag [#allocation3], 1
    %1037 = vsyncpa %s1036, 1
    %1038 = vsyncpa [#allocation5], 1

</llo_original>
